<compile_context>
chip_gen: v7x
topology: tpu7x:2x2x1
jax: 0.10.0
libtpu: 0.0.40
codegen_flags: <defaults>
</compile_context>

<pallas_src>
import functools

import jax
import jax.numpy as jnp
from jax.experimental import pallas as pl
from jax.experimental.pallas import tpu as pltpu

BN_EPS = 1e-5
VMEM_BUDGET_BYTES = 16 * 1024 * 1024   # conservative tile budget (fits v7x 32 MiB scoped)
VMEM_LIMIT_BYTES = 32 * 1024 * 1024    # raise v5e's 16 MiB scoped default
MAX_ROW_TILE = 8192


def _round_up(x, m):
    return (x + m - 1) // m * m


def _choose_row_tile(n, d_in, d_out, compute_bytes, out_bytes):
    """Largest row tile keeping double-buffered x/out tiles, the resident W block
    and the f32 matmul intermediate inside VMEM_BUDGET_BYTES."""
    w_bytes = 2 * d_in * d_out * compute_bytes                       # resident W (2 bufs)
    per_row = 2 * (d_in * compute_bytes + d_out * out_bytes) + d_out * 4
    avail = max(VMEM_BUDGET_BYTES - w_bytes, 2 * 1024 * 1024)
    tn = avail // per_row
    tn = min(tn, MAX_ROW_TILE, _round_up(n, 8))
    tn = max(8, (tn // 8) * 8)
    return int(tn)
    # TODO(synk): if d_in*d_out grows to several MiB, add a K grid axis so W is tiled
    # instead of fully resident (and/or cast W to bf16) to respect v7x's 64 MiB VMEM.


# --------------------------------------------------------------------------
# Pass 1: per-tile matmul + per-feature partial sum / sum-of-squares.
# Grid axis is fully parallel (each tile owns its own output block), so v7x's
# two TensorCores split the work; tail rows beyond n_real are masked out.
# --------------------------------------------------------------------------
def stats_kernel(n_real, row_tile, x_ref, w_ref, psum_ref, psq_ref):
    i = pl.program_id(0)
    row0 = i * row_tile
    rows = jax.lax.broadcasted_iota(jnp.int32, (row_tile, 1), 0) + row0
    valid = rows < n_real                                            # (tn, 1)

    x = jnp.where(valid, x_ref[...], 0.0)                            # zero tail rows
    z = jnp.dot(x, w_ref[...], preferred_element_type=jnp.float32)   # (tn, d_out), f32

    d_out = z.shape[-1]
    s = jnp.sum(z, axis=0, keepdims=True)                            # (1, d_out)
    sq = jnp.sum(z * z, axis=0, keepdims=True)                       # (1, d_out)
    psum_ref[...] = jnp.broadcast_to(s.reshape(1, 1, d_out), (1, 8, d_out))
    psq_ref[...] = jnp.broadcast_to(sq.reshape(1, 1, d_out), (1, 8, d_out))


# --------------------------------------------------------------------------
# Pass 2: recompute z = x @ W and apply the folded BatchNorm affine (one FMA).
# Out-of-bounds tail rows of the last tile are clipped by Pallas on write-back.
# --------------------------------------------------------------------------
def apply_kernel(x_ref, w_ref, scale_ref, shift_ref, o_ref):
    z = jnp.dot(x_ref[...], w_ref[...], preferred_element_type=jnp.float32)
    o_ref[...] = (z * scale_ref[...] + shift_ref[...]).astype(o_ref.dtype)


# --------------------------------------------------------------------------
# Wrapper
# --------------------------------------------------------------------------
def _embedding_block_impl(x, w, gamma, beta, *,
                          row_tile=None, eps=BN_EPS, compute_dtype=None):
    n, d_in = x.shape
    d_out = w.shape[1]
    out_dtype = x.dtype

    # Optional bf16 matmul inputs (recommended on all generations incl. v5e);
    # accumulation and BN math stay f32.
    if compute_dtype is not None:
        x_mm = x.astype(compute_dtype)
        w_mm = w.astype(compute_dtype)
    else:
        x_mm, w_mm = x, w
    cb = jnp.dtype(x_mm.dtype).itemsize
    ob = jnp.dtype(out_dtype).itemsize

    if row_tile is None:
        tn = _choose_row_tile(n, d_in, d_out, cb, ob)
    else:
        tn = max(8, _round_up(row_tile, 8))
    num_tiles = pl.cdiv(n, tn)

    cparams = pltpu.CompilerParams(
        dimension_semantics=("parallel",),
        vmem_limit_bytes=VMEM_LIMIT_BYTES)

    # ---- Pass 1: statistics --------------------------------------------------
    psum, psq = pl.pallas_call(
        functools.partial(stats_kernel, n, tn),
        out_shape=(
            jax.ShapeDtypeStruct((num_tiles, 8, d_out), jnp.float32),
            jax.ShapeDtypeStruct((num_tiles, 8, d_out), jnp.float32),
        ),
        grid_spec=pltpu.PrefetchScalarGridSpec(
            num_scalar_prefetch=0,
            grid=(num_tiles,),
            in_specs=[
                pl.BlockSpec((tn, d_in), lambda i: (i, 0)),          # x (row tiles)
                pl.BlockSpec((d_in, d_out), lambda i: (0, 0)),       # W (resident)
            ],
            out_specs=(
                pl.BlockSpec((1, 8, d_out), lambda i: (i, 0, 0)),    # partial sum
                pl.BlockSpec((1, 8, d_out), lambda i: (i, 0, 0)),    # partial sumsq
            ),
        ),
        compiler_params=cparams,
        cost_estimate=pl.CostEstimate(
            flops=2 * num_tiles * tn * d_in * d_out,
            transcendentals=0,
            bytes_accessed=n * d_in * cb + d_in * d_out * cb
                           + 2 * num_tiles * 8 * d_out * 4),
    )(x_mm, w_mm)

    # ---- Finalize BN affine (tiny, d_out-wide) in the wrapper ------------------
    inv_n = 1.0 / n
    tot = jnp.sum(psum[:, 0, :], axis=0)                             # (d_out,)
    tot_sq = jnp.sum(psq[:, 0, :], axis=0)
    mean = tot * inv_n
    var = jnp.maximum(tot_sq * inv_n - mean * mean, 0.0)             # biased variance
    inv_std = jax.lax.rsqrt(var + eps)
    g = gamma.reshape(-1).astype(jnp.float32)
    b = beta.reshape(-1).astype(jnp.float32)
    scale = (g * inv_std).reshape(1, d_out)
    shift = (b - mean * g * inv_std).reshape(1, d_out)

    # ---- Pass 2: recompute matmul + folded scale/shift into the output --------
    out = pl.pallas_call(
        apply_kernel,
        out_shape=jax.ShapeDtypeStruct((n, d_out), out_dtype),
        grid_spec=pltpu.PrefetchScalarGridSpec(
            num_scalar_prefetch=0,
            grid=(num_tiles,),
            in_specs=[
                pl.BlockSpec((tn, d_in), lambda i: (i, 0)),          # x (row tiles)
                pl.BlockSpec((d_in, d_out), lambda i: (0, 0)),       # W (resident)
                pl.BlockSpec((1, d_out), lambda i: (0, 0)),          # scale (resident)
                pl.BlockSpec((1, d_out), lambda i: (0, 0)),          # shift (resident)
            ],
            out_specs=pl.BlockSpec((tn, d_out), lambda i: (i, 0)),
        ),
        compiler_params=cparams,
        cost_estimate=pl.CostEstimate(
            flops=2 * num_tiles * tn * d_in * d_out + 2 * num_tiles * tn * d_out,
            transcendentals=0,
            bytes_accessed=n * d_in * cb + d_in * d_out * cb
                           + 2 * d_out * 4 + n * d_out * ob),
    )(x_mm, w_mm, scale, shift)

    return out


embedding_block = jax.jit(
    _embedding_block_impl,
    static_argnames=("row_tile", "eps", "compute_dtype"))


# --------------------------------------------------------------------------
# Parameter init matching weights_init_kaiming (Linear bias = 0 is dropped: it
# cancels exactly under training-mode BatchNorm; only valid in training mode).
# --------------------------------------------------------------------------
def init_params(key, input_dim, num_bottleneck, dtype=jnp.float32):
    std = (2.0 / num_bottleneck) ** 0.5        # kaiming_normal_, mode='fan_out'
    # PyTorch weight is [out, in]; store transpose [in, out] for x @ W.
    w = (jax.random.normal(key, (num_bottleneck, input_dim), dtype) * std).T
    gamma = jnp.ones((num_bottleneck,), dtype)
    beta = jnp.zeros((num_bottleneck,), dtype)
    return w, gamma, beta


def reference(x, w, gamma, beta):
    z = x @ w                                   # bias = 0 under kaiming init
    mean = jnp.mean(z, axis=0, keepdims=True)
    var = jnp.mean((z - mean) ** 2, axis=0, keepdims=True)   # biased variance
    return (z - mean) * jax.lax.rsqrt(var + BN_EPS) * gamma + beta


if __name__ == "__main__":
    # EmbeddingBlock(input_dim=32, droprate=0.0, num_bottleneck=128) on an [N=60, 32]
    # batch; row_tile=16 exercises the multi-tile grid plus in-kernel tail masking.
    # TODO(synk): droprate > 0 (training-mode Dropout) not implemented; the module is
    #             instantiated with droprate=0 so no Dropout layer exists.
    N, INPUT_DIM, NUM_BOTTLENECK = 60, 32, 128

    key = jax.random.PRNGKey(0)
    k_x, k_w = jax.random.split(key)
    x = jax.random.normal(k_x, (N, INPUT_DIM), jnp.float32)
    w, gamma, beta = init_params(k_w, INPUT_DIM, NUM_BOTTLENECK)

    ref = reference(x, w, gamma, beta)

    # Multi-tile path (4 row tiles, last tile has 12 real rows -> tail masking).
    out = jax.block_until_ready(embedding_block(x, w, gamma, beta, row_tile=16))
    assert out.shape == (N, NUM_BOTTLENECK)
    assert jnp.allclose(out, ref, atol=1e-4, rtol=1e-4)

    # Default path (row tile auto-derived from the VMEM budget -> single tile here).
    out_default = jax.block_until_ready(embedding_block(x, w, gamma, beta))
    assert jnp.allclose(out_default, ref, atol=1e-4, rtol=1e-4)

    # bf16 MXU path (f32 accumulation + f32 BN math), loose tolerance.
    out_bf16 = jax.block_until_ready(
        embedding_block(x, w, gamma, beta, compute_dtype=jnp.bfloat16))
    assert jnp.allclose(out_bf16, ref, atol=1e-1, rtol=1e-1)

    print("KERNEL_OK")
</pallas_src>

<mosaic_0001>
module attributes {stable_mosaic.version = 11 : i64} {
  func.func @stats_kernel(%arg0: i32, %arg1: memref<16x32xf32, #tpu.memory_space<vmem>>, %arg2: memref<32x128xf32, #tpu.memory_space<vmem>>, %arg3: memref<1x8x128xf32, #tpu.memory_space<vmem>>, %arg4: memref<1x8x128xf32, #tpu.memory_space<vmem>>) attributes {dimension_semantics = [#tpu.dimension_semantics<parallel>], iteration_bounds = array<i64: 4>, scalar_prefetch = 0 : i64, scratch_operands = 0 : i64, tpu.core_type = #tpu.core_type<tc>, window_params = [{transform_indices = @transform_0, window_bounds = array<i64: 16, 32>}, {pipeline_mode = #tpu.pipeline_mode<synchronous>, transform_indices = @transform_1, window_bounds = array<i64: 32, 128>}, {transform_indices = @transform_2, window_bounds = array<i64: 1, 8, 128>}, {transform_indices = @transform_3, window_bounds = array<i64: 1, 8, 128>}]} {
    %c16_i32 = arith.constant 16 : i32
    %0 = arith.muli %arg0, %c16_i32 : i32
    %1 = tpu.iota {dimensions = array<i32: 0>} : vector<16x1xi32>
    %2 = vector.broadcast %0 : i32 to vector<16x1xi32>
    %3 = arith.addi %1, %2 : vector<16x1xi32>
    %c60_i32 = arith.constant 60 : i32
    %4 = vector.broadcast %c60_i32 : i32 to vector<16x1xi32>
    %5 = arith.cmpi slt, %3, %4 : vector<16x1xi32>
    %c0 = arith.constant 0 : index
    %c0_0 = arith.constant 0 : index
    %6 = vector.load %arg1[%c0, %c0_0] : memref<16x32xf32, #tpu.memory_space<vmem>>, vector<16x32xf32>
    %cst = arith.constant 0.000000e+00 : f32
    %7 = vector.shape_cast %5 : vector<16x1xi1> to vector<16x1xi1>
    %8 = vector.broadcast %7 : vector<16x1xi1> to vector<16x32xi1>
    %9 = vector.broadcast %cst : f32 to vector<16x32xf32>
    %10 = arith.select %8, %6, %9 : vector<16x32xi1>, vector<16x32xf32>
    %c0_1 = arith.constant 0 : index
    %c0_2 = arith.constant 0 : index
    %11 = vector.load %arg2[%c0_1, %c0_2] : memref<32x128xf32, #tpu.memory_space<vmem>>, vector<32x128xf32>
    %cst_3 = arith.constant dense<0.000000e+00> : vector<16x128xf32>
    %12 = tpu.matmul %10, %11, %cst_3 {dimension_numbers = #tpu.dot_dimension_numbers<[1], [0], [0], [1], [0, 0, 1, 1], [], []>} : vector<16x32xf32>, vector<32x128xf32>, vector<16x128xf32> -> vector<16x128xf32>
    %cst_4 = arith.constant dense<0.000000e+00> : vector<128xf32>
    %13 = vector.multi_reduction <add>, %12, %cst_4 [0] : vector<16x128xf32> to vector<128xf32>
    %14 = vector.shape_cast %13 : vector<128xf32> to vector<1x128xf32>
    %15 = arith.mulf %12, %12 : vector<16x128xf32>
    %cst_5 = arith.constant dense<0.000000e+00> : vector<128xf32>
    %16 = vector.multi_reduction <add>, %15, %cst_5 [0] : vector<16x128xf32> to vector<128xf32>
    %17 = vector.shape_cast %16 : vector<128xf32> to vector<1x128xf32>
    %18 = vector.shape_cast %14 : vector<1x128xf32> to vector<1x1x128xf32>
    %19 = vector.shape_cast %18 : vector<1x1x128xf32> to vector<1x1x128xf32>
    %20 = vector.broadcast %19 : vector<1x1x128xf32> to vector<1x8x128xf32>
    %c0_6 = arith.constant 0 : index
    %c0_7 = arith.constant 0 : index
    %c0_8 = arith.constant 0 : index
    %21 = vector.load %arg3[%c0_6, %c0_7, %c0_8] : memref<1x8x128xf32, #tpu.memory_space<vmem>>, vector<1x8x128xf32>
    tpu.vector_store %arg3[%c0_6, %c0_7, %c0_8], %20 {strides = array<i32>} : memref<1x8x128xf32, #tpu.memory_space<vmem>>, vector<1x8x128xf32>,
    %22 = vector.shape_cast %17 : vector<1x128xf32> to vector<1x1x128xf32>
    %23 = vector.shape_cast %22 : vector<1x1x128xf32> to vector<1x1x128xf32>
    %24 = vector.broadcast %23 : vector<1x1x128xf32> to vector<1x8x128xf32>
    %c0_9 = arith.constant 0 : index
    %c0_10 = arith.constant 0 : index
    %c0_11 = arith.constant 0 : index
    %25 = vector.load %arg4[%c0_9, %c0_10, %c0_11] : memref<1x8x128xf32, #tpu.memory_space<vmem>>, vector<1x8x128xf32>
    tpu.vector_store %arg4[%c0_9, %c0_10, %c0_11], %24 {strides = array<i32>} : memref<1x8x128xf32, #tpu.memory_space<vmem>>, vector<1x8x128xf32>,
    return
  }
  func.func @transform_0(%arg0: i32) -> (i32, i32) {
    %c0_i32 = arith.constant 0 : i32
    %c0_i32_0 = arith.constant 0 : i32
    return %arg0, %c0_i32 : i32, i32
  }
  func.func @transform_1(%arg0: i32) -> (i32, i32) {
    %c0_i32 = arith.constant 0 : i32
    %c0_i32_0 = arith.constant 0 : i32
    %c0_i32_1 = arith.constant 0 : i32
    return %c0_i32, %c0_i32_0 : i32, i32
  }
  func.func @transform_2(%arg0: i32) -> (i32, i32, i32) {
    %c0_i32 = arith.constant 0 : i32
    %c0_i32_0 = arith.constant 0 : i32
    %c0_i32_1 = arith.constant 0 : i32
    return %arg0, %c0_i32, %c0_i32_0 : i32, i32, i32
  }
  func.func @transform_3(%arg0: i32) -> (i32, i32, i32) {
    %c0_i32 = arith.constant 0 : i32
    %c0_i32_0 = arith.constant 0 : i32
    %c0_i32_1 = arith.constant 0 : i32
    return %arg0, %c0_i32, %c0_i32_0 : i32, i32, i32
  }
}

module attributes {stable_mosaic.version = 11 : i64} {
  func.func @apply_kernel(%arg0: i32, %arg1: memref<16x32xf32, #tpu.memory_space<vmem>>, %arg2: memref<32x128xf32, #tpu.memory_space<vmem>>, %arg3: memref<1x128xf32, #tpu.memory_space<vmem>>, %arg4: memref<1x128xf32, #tpu.memory_space<vmem>>, %arg5: memref<16x128xf32, #tpu.memory_space<vmem>>) attributes {dimension_semantics = [#tpu.dimension_semantics<parallel>], iteration_bounds = array<i64: 4>, scalar_prefetch = 0 : i64, scratch_operands = 0 : i64, tpu.core_type = #tpu.core_type<tc>, window_params = [{transform_indices = @transform_0, window_bounds = array<i64: 16, 32>}, {pipeline_mode = #tpu.pipeline_mode<synchronous>, transform_indices = @transform_1, window_bounds = array<i64: 32, 128>}, {pipeline_mode = #tpu.pipeline_mode<synchronous>, transform_indices = @transform_2, window_bounds = array<i64: 1, 128>}, {pipeline_mode = #tpu.pipeline_mode<synchronous>, transform_indices = @transform_3, window_bounds = array<i64: 1, 128>}, {transform_indices = @transform_4, window_bounds = array<i64: 16, 128>}]} {
    %c0 = arith.constant 0 : index
    %c0_0 = arith.constant 0 : index
    %0 = vector.load %arg1[%c0, %c0_0] : memref<16x32xf32, #tpu.memory_space<vmem>>, vector<16x32xf32>
    %c0_1 = arith.constant 0 : index
    %c0_2 = arith.constant 0 : index
    %1 = vector.load %arg2[%c0_1, %c0_2] : memref<32x128xf32, #tpu.memory_space<vmem>>, vector<32x128xf32>
    %cst = arith.constant dense<0.000000e+00> : vector<16x128xf32>
    %2 = tpu.matmul %0, %1, %cst {dimension_numbers = #tpu.dot_dimension_numbers<[1], [0], [0], [1], [0, 0, 1, 1], [], []>} : vector<16x32xf32>, vector<32x128xf32>, vector<16x128xf32> -> vector<16x128xf32>
    %c0_3 = arith.constant 0 : index
    %c0_4 = arith.constant 0 : index
    %3 = vector.load %arg3[%c0_3, %c0_4] : memref<1x128xf32, #tpu.memory_space<vmem>>, vector<1x128xf32>
    %4 = vector.broadcast %3 : vector<1x128xf32> to vector<16x128xf32>
    %5 = arith.mulf %2, %4 : vector<16x128xf32>
    %c0_5 = arith.constant 0 : index
    %c0_6 = arith.constant 0 : index
    %6 = vector.load %arg4[%c0_5, %c0_6] : memref<1x128xf32, #tpu.memory_space<vmem>>, vector<1x128xf32>
    %7 = vector.broadcast %6 : vector<1x128xf32> to vector<16x128xf32>
    %8 = arith.addf %5, %7 : vector<16x128xf32>
    %c0_7 = arith.constant 0 : index
    %c0_8 = arith.constant 0 : index
    %9 = vector.load %arg5[%c0_7, %c0_8] : memref<16x128xf32, #tpu.memory_space<vmem>>, vector<16x128xf32>
    tpu.vector_store %arg5[%c0_7, %c0_8], %8 {strides = array<i32>} : memref<16x128xf32, #tpu.memory_space<vmem>>, vector<16x128xf32>,
    return
  }
  func.func @transform_0(%arg0: i32) -> (i32, i32) {
    %c0_i32 = arith.constant 0 : i32
    %c0_i32_0 = arith.constant 0 : i32
    return %arg0, %c0_i32 : i32, i32
  }
  func.func @transform_1(%arg0: i32) -> (i32, i32) {
    %c0_i32 = arith.constant 0 : i32
    %c0_i32_0 = arith.constant 0 : i32
    %c0_i32_1 = arith.constant 0 : i32
    return %c0_i32, %c0_i32_0 : i32, i32
  }
  func.func @transform_2(%arg0: i32) -> (i32, i32) {
    %c0_i32 = arith.constant 0 : i32
    %c0_i32_0 = arith.constant 0 : i32
    %c0_i32_1 = arith.constant 0 : i32
    return %c0_i32, %c0_i32_0 : i32, i32
  }
  func.func @transform_3(%arg0: i32) -> (i32, i32) {
    %c0_i32 = arith.constant 0 : i32
    %c0_i32_0 = arith.constant 0 : i32
    %c0_i32_1 = arith.constant 0 : i32
    return %c0_i32, %c0_i32_0 : i32, i32
  }
  func.func @transform_4(%arg0: i32) -> (i32, i32) {
    %c0_i32 = arith.constant 0 : i32
    %c0_i32_0 = arith.constant 0 : i32
    return %arg0, %c0_i32 : i32, i32
  }
}

</mosaic_0001>

<llo_original>
// kernel: _embedding_block_impl.2
$region0: #{_embedding_block_impl.2}
  #allocation0 [shape = 'u32[]', space=smem, size = 0x4, offset = 0x4, fixed_abs, tag = 'smem constant byte address 0x4 - core index']
  #allocation1 [shape = 'u32[144,128]{1,0:T(1,128)}', space=vmem, size = 0x12000, scoped, tag = 'internal scratch']
  %s0 = inlined_call_operand.vmem [shape: f32[60,32], index: 0, kind: input, shape index: {}]
  %s1 = inlined_call_operand.vmem [shape: f32[32,128], index: 1, kind: input, shape index: {}]
  %s2 = inlined_call_operand.vmem [shape: f32[4,8,128], index: 2, kind: output, shape index: {0}]
  %s3 = inlined_call_operand.vmem [shape: f32[4,8,128], index: 3, kind: output, shape index: {1}]
  %4 = xla_tuple %s2, %s3
  %s5 = sld [smem:[#allocation0]]
  $region49: #{_embedding_block_impl.2} parent=0
    _
  %s7 = ssub.s32 1, %s5
  %s8 = scalar_select 0, %s7, %s5
  loop: start=0, step=1, limit=6
  $region2: #{_embedding_block_impl.2} parent=0 // loop_pre_header
    _
  $region3: #{_embedding_block_impl.2} parent=0 // loop_header
    %s10 = sphi 0, %s14
    %p11 = scmp.ge.s32.totalorder %s10, 6
    %s20 = sphi 0, %s22
    %s23 = sphi 0, %s20
    %s24 = sphi 0, %s23
    %s40 = sphi 0, %s24
    %s44 = sphi 0, %s44
    %s46 = sphi 0, %s44
    %s47 = sphi 0, %s46
    %s61 = sphi 0, %s47
    %s67 = sphi 0, %s69
    %s70 = sphi 0, %s67
    %s71 = sphi 0, %s70
    %s87 = sphi 0, %s71
    %s93 = sphi 0, %s95
    %s96 = sphi 0, %s93
    %s97 = sphi 0, %s96
    %s113 = sphi 0, %s97
  $region4: #{_embedding_block_impl.2} parent=0 // loop_header_branch
    %13 = sbr.rel (%p11) target = $region8
  $region5: #{_embedding_block_impl.2} parent=0 // loop_body
    %s15 = ssub.s32 %s10, 1
    %s16 = ssub.s32 %s10, 2
    %s17 = sadd.s32 %s10, 1
    %s18 = ssub.s32 %s10, %s17
    %p19 = scmp.eq.s32.totalorder %s18, 0
    %s21 = sadd.s32 %s20, 1
    %s22 = scalar_select %p19, %s20, %s21
    %p25 = pneg %p19
    %p26 = scmp.eq.s32.totalorder %s10, 3
    %p27 = por %p25, %p26
    %p28 = scmp.ne.s32.totalorder %s20, %s23
    %p29 = scmp.eq.s32.totalorder %s10, 0
    %p30 = por %p28, %p29
    %p31 = scmp.ne.s32.totalorder %s20, %s23
    %p32 = scmp.eq.s32.totalorder %s15, 3
    %p33 = por %p31, %p32
    %p34 = scmp.ne.s32.totalorder %s23, %s24
    %p35 = scmp.eq.s32.totalorder %s15, 0
    %p36 = por %p34, %p35
    %p37 = scmp.ne.s32.totalorder %s23, %s24
    %p38 = scmp.eq.s32.totalorder %s16, 3
    %p39 = por %p37, %p38
    %p41 = scmp.ne.s32.totalorder %s24, %s40
    %p42 = scmp.eq.s32.totalorder %s16, 0
    %p43 = por %p41, %p42
    %s45 = sadd.s32 %s44, 1
    %p48 = scmp.eq.s32.totalorder %s10, 3
    %p49 = scmp.ne.s32.totalorder %s44, %s46
    %p50 = scmp.eq.s32.totalorder %s10, 0
    %p51 = por %p49, %p50
    %p52 = scmp.ne.s32.totalorder %s44, %s46
    %p53 = scmp.eq.s32.totalorder %s15, 3
    %p54 = por %p52, %p53
    %p55 = scmp.ne.s32.totalorder %s46, %s47
    %p56 = scmp.eq.s32.totalorder %s15, 0
    %p57 = por %p55, %p56
    %p58 = scmp.ne.s32.totalorder %s46, %s47
    %p59 = scmp.eq.s32.totalorder %s16, 3
    %p60 = por %p58, %p59
    %p62 = scmp.ne.s32.totalorder %s47, %s61
    %p63 = scmp.eq.s32.totalorder %s16, 0
    %p64 = por %p62, %p63
    %s65 = ssub.s32 %s10, %s17
    %p66 = scmp.eq.s32.totalorder %s65, 0
    %s68 = sadd.s32 %s67, 1
    %s69 = scalar_select %p66, %s67, %s68
    %p72 = pneg %p66
    %p73 = scmp.eq.s32.totalorder %s10, 3
    %p74 = por %p72, %p73
    %p75 = scmp.ne.s32.totalorder %s67, %s70
    %p76 = scmp.eq.s32.totalorder %s10, 0
    %p77 = por %p75, %p76
    %p78 = scmp.ne.s32.totalorder %s67, %s70
    %p79 = scmp.eq.s32.totalorder %s15, 3
    %p80 = por %p78, %p79
    %p81 = scmp.ne.s32.totalorder %s70, %s71
    %p82 = scmp.eq.s32.totalorder %s15, 0
    %p83 = por %p81, %p82
    %p84 = scmp.ne.s32.totalorder %s70, %s71
    %p85 = scmp.eq.s32.totalorder %s16, 3
    %p86 = por %p84, %p85
    %p88 = scmp.ne.s32.totalorder %s71, %s87
    %p89 = scmp.eq.s32.totalorder %s16, 0
    %p90 = por %p88, %p89
    %s91 = ssub.s32 %s10, %s17
    %p92 = scmp.eq.s32.totalorder %s91, 0
    %s94 = sadd.s32 %s93, 1
    %s95 = scalar_select %p92, %s93, %s94
    %p98 = pneg %p92
    %p99 = scmp.eq.s32.totalorder %s10, 3
    %p100 = por %p98, %p99
    %p101 = scmp.ne.s32.totalorder %s93, %s96
    %p102 = scmp.eq.s32.totalorder %s10, 0
    %p103 = por %p101, %p102
    %p104 = scmp.ne.s32.totalorder %s93, %s96
    %p105 = scmp.eq.s32.totalorder %s15, 3
    %p106 = por %p104, %p105
    %p107 = scmp.ne.s32.totalorder %s96, %s97
    %p108 = scmp.eq.s32.totalorder %s15, 0
    %p109 = por %p107, %p108
    %p110 = scmp.ne.s32.totalorder %s96, %s97
    %p111 = scmp.eq.s32.totalorder %s16, 3
    %p112 = por %p110, %p111
    %p114 = scmp.ne.s32.totalorder %s97, %s113
    %p115 = scmp.eq.s32.totalorder %s16, 0
    %p116 = por %p114, %p115
    %p117 = scmp.le.s32.totalorder 1, %s10
    %p118 = scmp.lt.s32.totalorder %s10, 5
    %p119 = pnand %p117, %p118
    %p120 = pneg %p119
    // Predicated region
    $region9: #{_embedding_block_impl.2} parent=5 // pred_check
      _
    $region10: #{_embedding_block_impl.2} parent=5 // pred_check_branch
      %122 = sbr.rel (%p119) target = $region12
    $region11: #{_embedding_block_impl.2} parent=5 // pred_region
      %s123 = ssub.s32 %s10, 1
      // Predicated region
      $region13: #{_embedding_block_impl.2} parent=11 // pred_check
        %p124 = pneg %p57
      $region14: #{_embedding_block_impl.2} parent=11 // pred_check_branch
        %126 = sbr.rel (%p124) target = $region16
      $region15: #{_embedding_block_impl.2} parent=11 // pred_region
        _
      $region16: #{_embedding_block_impl.2} parent=11 // pred_fallthru
        _
    $region12: #{_embedding_block_impl.2} parent=5 // pred_fallthru
      _
    %p127 = scmp.lt.s32.totalorder %s10, 4
    // Predicated region
    $region17: #{_embedding_block_impl.2} parent=5 // pred_check
      %p128 = pneg %p127
    $region18: #{_embedding_block_impl.2} parent=5 // pred_check_branch
      %130 = sbr.rel (%p128) target = $region20
    $region19: #{_embedding_block_impl.2} parent=5 // pred_region
      // Predicated region
      $region21: #{_embedding_block_impl.2} parent=19 // pred_check
        %p131 = pneg %p30
      $region22: #{_embedding_block_impl.2} parent=19 // pred_check_branch
        %133 = sbr.rel (%p131) target = $region24
      $region23: #{_embedding_block_impl.2} parent=19 // pred_region
        %s134 = smul.u32 2, %s10
        %p135 = scmp.lt.s32.totalorder %s134, 7
        %s136 = scalar_select %p135, %s134, 7
        %s137 = smul.addr %s136, 8
        %s138 = scalar_lea.vmem %s0, %s137
        %s139 = smul.u32 2, %s10
      $region24: #{_embedding_block_impl.2} parent=19 // pred_fallthru
        _
    $region20: #{_embedding_block_impl.2} parent=5 // pred_fallthru
      _
    %p140 = scmp.le.s32.totalorder 1, %s10
    %p141 = scmp.lt.s32.totalorder %s10, 5
    %p142 = pnand %p140, %p141
    %p143 = pneg %p142
    // Predicated region
    $region25: #{_embedding_block_impl.2} parent=5 // pred_check
      _
    $region26: #{_embedding_block_impl.2} parent=5 // pred_check_branch
      %145 = sbr.rel (%p142) target = $region28
    $region27: #{_embedding_block_impl.2} parent=5 // pred_region
      %s146 = ssub.s32 %s10, 1
      %s147 = smul.u32 2, %s15
      %p148 = scmp.lt.s32.totalorder %s147, 7
      %s149 = scalar_select %p148, %s147, 7
      %s150 = smul.addr %s149, 8
      %s151 = scalar_lea.vmem %s0, %s150
      %p152 = pneg %p36
      %p153 = pneg %p33
      %p154 = pneg %p57
      %p155 = pneg %p54
      %p156 = pneg %p83
      %p157 = pneg %p80
      %p158 = scmp.lt.s32.totalorder %s15, 3
      %s159 = scalar_select %p158, %s15, 3
      %s160 = smul.addr %s159, 8
      %s161 = scalar_lea.vmem %s2, %s160
      %p162 = pneg %p109
      %p163 = pneg %p106
      %p164 = scmp.lt.s32.totalorder %s15, 3
      %s165 = scalar_select %p164, %s15, 3
      %s166 = smul.addr %s165, 8
      %s167 = scalar_lea.vmem %s3, %s166
      %s168 = smul.u32 2, %s15
      %p169 = scmp.lt.s32.totalorder %s168, 7
      %s170 = scalar_select %p169, %s168, 7
      %s171 = smul.addr %s170, 8
      %s172 = scalar_lea.vmem %s0, %s171
      %s173 = smul.u32 2, %s15
      %p174 = scmp.lt.s32.totalorder %s15, 3
      %s175 = scalar_select %p174, %s15, 3
      %s176 = smul.addr %s175, 8
      %s177 = scalar_lea.vmem %s2, %s176
      %p178 = scmp.lt.s32.totalorder %s15, 3
      %s179 = scalar_select %p178, %s15, 3
      %s180 = smul.addr %s179, 8
      %s181 = scalar_lea.vmem %s3, %s180
      %s182 = smul.u32 %s15, 16
      %v183 = vlaneseq
      %v184 = vshrl.u32 %v183, 7
      %v185 = vadd.s32 %v184, 8
      %v186 = vstv %s182
      %v187 = vadd.s32 %v184, %v186
      %v188 = vadd.s32 %v185, %v186
      %vm189 = vcmp.lt.s32.totalorder %v187, 60
      %vm190 = vcmp.lt.s32.totalorder %v188, 60
      %v191 = vld [vmem:[%s172] sm:$0xff]
      %v192 = vld [vmem:[%s172 + $0x8] sm:$0xff]
      %v193 = vsel %vm189, 1, 0
      %v194 = vsel %vm190, 1, 0
      %vm195 = vcmp.eq.s32.totalorder %v193, 1
      %vm196 = vcmp.eq.s32.totalorder %v194, 1
      %v197 = vsel %vm195, %v191, 0.0
      %v198 = vsel %vm196, %v192, 0.0
      %v199 = vld [vmem:[%s1] sm:$0xff]
      %v200 = vld [vmem:[%s1 + $0x8] sm:$0xff]
      %v201 = vld [vmem:[%s1 + $0x10] sm:$0xff]
      %v202 = vld [vmem:[%s1 + $0x18] sm:$0xff]
      %vm203 = vcmask 261120
      %v205 = vsel %vm203, %v197, 0
      %v208 = vsel %vm203, %v198, 0
      %210 = vmatprep.subr.mxu0 0.0
      %211 = vmatpush1.msra.mxu0 %v199
      %212 = vmatprep.subr.mxu0 0.0
      %213 = vmatpush1.msra.mxu0 %v200
      %214 = vmatprep.subr.mxu0 0.0
      %215 = vmatpush1.msra.mxu0 %v201
      %216 = vmatprep.subr.mxu0 0.0
      %217 = vmatpush1.msra.mxu0 %v202
      %218 = vmatprep.subr.mxu0 0.0
      %219 = vmatpush1.msra.mxu0 0.0
      %220 = vmatprep.subr.mxu0 0.0
      %221 = vmatpush1.msra.mxu0 0.0
      %222 = vmatprep.subr.mxu0 0.0
      %223 = vmatpush1.msra.mxu0 0.0
      %224 = vmatprep.subr.mxu0 0.0
      %225 = vmatpush1.msra.mxu0 0.0
      %226 = vmatprep.subr.mxu0 0.0
      %227 = vmatpush1.msra.mxu0 0.0
      %228 = vmatprep.subr.mxu0 0.0
      %229 = vmatpush1.msra.mxu0 0.0
      %230 = vmatprep.subr.mxu0 0.0
      %231 = vmatpush1.msra.mxu0 0.0
      %232 = vmatprep.subr.mxu0 0.0
      %233 = vmatpush1.msra.mxu0 0.0
      %234 = vmatprep.subr.mxu0 0.0
      %235 = vmatpush1.msra.mxu0 0.0
      %236 = vmatprep.subr.mxu0 0.0
      %237 = vmatpush1.msra.mxu0 0.0
      %238 = vmatprep.subr.mxu0 0.0
      %239 = vmatpush1.msra.mxu0 0.0
      %240 = vmatprep.subr.mxu0 0.0
      %241 = vmatpush1.msra.mxu0 0.0
      %242 = vmatprep.subr.mxu0 0.0
      %243 = vmatpush1.msra.mxu0 0.0
      %244 = vmatprep.subr.mxu0 0.0
      %245 = vmatpush1.msra.mxu0 0.0
      %246 = vmatprep.subr.mxu0 0.0
      %247 = vmatpush1.msra.mxu0 0.0
      %248 = vmatprep.subr.mxu0 0.0
      %249 = vmatpush1.msra.mxu0 0.0
      %250 = vmatprep.subr.mxu0 0.0
      %251 = vmatpush1.msra.mxu0 0.0
      %252 = vmatprep.subr.mxu0 0.0
      %253 = vmatpush1.msra.mxu0 0.0
      %254 = vmatprep.subr.mxu0 0.0
      %255 = vmatpush1.msra.mxu0 0.0
      %256 = vmatprep.subr.mxu0 0.0
      %257 = vmatpush1.msra.mxu0 0.0
      %258 = vmatprep.subr.mxu0 0.0
      %259 = vmatpush1.msra.mxu0 0.0
      %260 = vmatprep.subr.mxu0 0.0
      %261 = vmatpush1.msra.mxu0 0.0
      %262 = vmatprep.subr.mxu0 0.0
      %263 = vmatpush1.msra.mxu0 0.0
      %264 = vmatprep.subr.mxu0 0.0
      %265 = vmatpush1.msra.mxu0 0.0
      %266 = vmatprep.subr.mxu0 0.0
      %267 = vmatpush1.msra.mxu0 0.0
      %268 = vmatprep.subr.mxu0 0.0
      %269 = vmatpush1.msra.mxu0 0.0
      %270 = vmatprep.subr.mxu0 0.0
      %271 = vmatpush1.msra.mxu0 0.0
      %272 = vmatprep.subr.mxu0 0.0
      %273 = vmatpush1.msra.mxu0 0.0
      %274 = vmatprep.mubr.f32.mxu0 0.0
      %275 = vmatmul.mubr.f32.gmra.mrb[0].mxu0 %v205
      %v276 = vpop.f32.mrb[0].mxu0
      %v277 = vadd.f32 0.0, %v276
      %v278 = vpop.f32.mrb[0].mxu0
      %279 = vmatprep.mubr.f32.mxu0 0.0
      %280 = vmatmul.mubr.f32.gmra.mrb[0].mxu0 %v208
      %v281 = vpop.f32.mrb[0].mxu0
      %v282 = vadd.f32 0.0, %v281
      %v283 = vpop.f32.mrb[0].mxu0
      %284 = vdwg.mxu0
      %v285 = vadd.f32 %v277, %v282
      %v286 = vrot.slane %v285, 4
      %v287 = vadd.f32 %v285, %v286
      %v288 = vrot.slane %v287, 2
      %v289 = vadd.f32 %v287, %v288
      %v290 = vrot.slane %v289, 1
      %v291 = vadd.f32 %v289, %v290
      %v292 = vmul.f32 %v277, %v277
      %v293 = vmul.f32 %v282, %v282
      %v294 = vadd.f32 %v292, %v293
      %v295 = vrot.slane %v294, 4
      %v296 = vadd.f32 %v294, %v295
      %v297 = vrot.slane %v296, 2
      %v298 = vadd.f32 %v296, %v297
      %v299 = vrot.slane %v298, 1
      %v300 = vadd.f32 %v298, %v299
      %301 = vst [vmem:[%s177] sm:$0xff] %v291
      %302 = vst [vmem:[%s181] sm:$0xff] %v300
      %p303 = scmp.lt.s32.totalorder %s15, 3
      %s304 = scalar_select %p303, %s15, 3
      %s305 = smul.addr %s304, 8
      %s306 = scalar_lea.vmem %s2, %s305
      %p307 = scmp.lt.s32.totalorder %s15, 3
      %s308 = scalar_select %p307, %s15, 3
      %s309 = smul.addr %s308, 8
      %s310 = scalar_lea.vmem %s3, %s309
      // Predicated region
      $region29: #{_embedding_block_impl.2} parent=27 // pred_check
        %p311 = pneg %p80
      $region30: #{_embedding_block_impl.2} parent=27 // pred_check_branch
        %313 = sbr.rel (%p311) target = $region32
      $region31: #{_embedding_block_impl.2} parent=27 // pred_region
        _
      $region32: #{_embedding_block_impl.2} parent=27 // pred_fallthru
        _
      // Predicated region
      $region33: #{_embedding_block_impl.2} parent=27 // pred_check
        %p314 = pneg %p106
      $region34: #{_embedding_block_impl.2} parent=27 // pred_check_branch
        %316 = sbr.rel (%p314) target = $region36
      $region35: #{_embedding_block_impl.2} parent=27 // pred_region
        _
      $region36: #{_embedding_block_impl.2} parent=27 // pred_fallthru
        _
    $region28: #{_embedding_block_impl.2} parent=5 // pred_fallthru
      _
    %p317 = scmp.le.s32.totalorder 2, %s10
    // Predicated region
    $region37: #{_embedding_block_impl.2} parent=5 // pred_check
      %p318 = pneg %p317
    $region38: #{_embedding_block_impl.2} parent=5 // pred_check_branch
      %320 = sbr.rel (%p318) target = $region40
    $region39: #{_embedding_block_impl.2} parent=5 // pred_region
      %s321 = ssub.s32 %s10, 2
      // Predicated region
      $region41: #{_embedding_block_impl.2} parent=39 // pred_check
        %p322 = pneg %p86
      $region42: #{_embedding_block_impl.2} parent=39 // pred_check_branch
        %324 = sbr.rel (%p322) target = $region44
      $region43: #{_embedding_block_impl.2} parent=39 // pred_region
        %p325 = scmp.lt.s32.totalorder %s16, 3
        %s326 = scalar_select %p325, %s16, 3
        %s327 = smul.addr %s326, 8
        %s328 = scalar_lea.vmem %s2, %s327
      $region44: #{_embedding_block_impl.2} parent=39 // pred_fallthru
        _
      // Predicated region
      $region45: #{_embedding_block_impl.2} parent=39 // pred_check
        %p329 = pneg %p112
      $region46: #{_embedding_block_impl.2} parent=39 // pred_check_branch
        %331 = sbr.rel (%p329) target = $region48
      $region47: #{_embedding_block_impl.2} parent=39 // pred_region
        %p332 = scmp.lt.s32.totalorder %s16, 3
        %s333 = scalar_select %p332, %s16, 3
        %s334 = smul.addr %s333, 8
        %s335 = scalar_lea.vmem %s3, %s334
      $region48: #{_embedding_block_impl.2} parent=39 // pred_fallthru
        _
    $region40: #{_embedding_block_impl.2} parent=5 // pred_fallthru
      _
  $region6: #{_embedding_block_impl.2} parent=0 // loop_footer
    %s14 = sadd.s32 1, %s10
  $region7: #{_embedding_block_impl.2} parent=0 // loop_footer_branch
    %9 = sbr.rel target = $region3
  $region8: #{_embedding_block_impl.2} parent=0 // loop_exit
    _

// kernel: _embedding_block_impl.3
$region0: #{_embedding_block_impl.3}
  #allocation0 [shape = 'u32[]', space=smem, size = 0x4, offset = 0x4, fixed_abs, tag = 'smem constant byte address 0x4 - core index']
  #allocation1 [shape = 'u32[144,128]{1,0:T(1,128)}', space=vmem, size = 0x12000, scoped, tag = 'internal scratch']
  %s0 = inlined_call_operand.vmem [shape: f32[60,32], index: 0, kind: input, shape index: {}]
  %s1 = inlined_call_operand.vmem [shape: f32[32,128], index: 1, kind: input, shape index: {}]
  %s2 = inlined_call_operand.vmem [shape: f32[1,128], index: 2, kind: input, shape index: {}]
  %s3 = inlined_call_operand.vmem [shape: f32[1,128], index: 3, kind: input, shape index: {}]
  %s4 = inlined_call_operand.hbm [shape: f32[60,128], index: 4, kind: output, shape index: {}]
  %s5 = sld [smem:[#allocation0]]
  $region49: #{_embedding_block_impl.3} parent=0
    _
  %s7 = ssub.s32 1, %s5
  %s8 = scalar_select 0, %s7, %s5
  $region1: #{_embedding_block_impl.3} parent=0
    #allocation2 [shape = 'u8[16384]{0}', space=vmem, size = 0x4000, scoped, tag = 'output window, operand 0']
    #allocation3 [shape = 's32[2]{0}', space=sflag, size = 0x8, scoped, tag = 'scoped memory for _embedding_block_impl.3']
    %9 = vsyncpa [#allocation3], 0
    %s10 = scalar_lea.sflag [#allocation3], 1
    %11 = vsyncpa %s10, 0
    loop: start=0, step=1, limit=6
    $region2: #{_embedding_block_impl.3} parent=1 // loop_pre_header
      _
    $region3: #{_embedding_block_impl.3} parent=1 // loop_header
      %s13 = sphi 0, %s17
      %p14 = scmp.ge.s32.totalorder %s13, 6
      %s23 = sphi 0, %s25
      %s26 = sphi 0, %s23
      %s27 = sphi 0, %s26
      %s43 = sphi 0, %s27
      %s47 = sphi 0, %s47
      %s49 = sphi 0, %s47
      %s50 = sphi 0, %s49
      %s64 = sphi 0, %s50
      %s68 = sphi 0, %s68
      %s70 = sphi 0, %s68
      %s71 = sphi 0, %s70
      %s85 = sphi 0, %s71
      %s89 = sphi 0, %s89
      %s91 = sphi 0, %s89
      %s92 = sphi 0, %s91
      %s106 = sphi 0, %s92
      %s112 = sphi 0, %s114
      %s115 = sphi 0, %s112
      %s116 = sphi 0, %s115
      %s132 = sphi 0, %s116
    $region4: #{_embedding_block_impl.3} parent=1 // loop_header_branch
      %16 = sbr.rel (%p14) target = $region8
    $region5: #{_embedding_block_impl.3} parent=1 // loop_body
      %s18 = ssub.s32 %s13, 1
      %s19 = ssub.s32 %s13, 2
      %s20 = sadd.s32 %s13, 1
      %s21 = ssub.s32 %s13, %s20
      %p22 = scmp.eq.s32.totalorder %s21, 0
      %s24 = sadd.s32 %s23, 1
      %s25 = scalar_select %p22, %s23, %s24
      %p28 = pneg %p22
      %p29 = scmp.eq.s32.totalorder %s13, 3
      %p30 = por %p28, %p29
      %p31 = scmp.ne.s32.totalorder %s23, %s26
      %p32 = scmp.eq.s32.totalorder %s13, 0
      %p33 = por %p31, %p32
      %p34 = scmp.ne.s32.totalorder %s23, %s26
      %p35 = scmp.eq.s32.totalorder %s18, 3
      %p36 = por %p34, %p35
      %p37 = scmp.ne.s32.totalorder %s26, %s27
      %p38 = scmp.eq.s32.totalorder %s18, 0
      %p39 = por %p37, %p38
      %p40 = scmp.ne.s32.totalorder %s26, %s27
      %p41 = scmp.eq.s32.totalorder %s19, 3
      %p42 = por %p40, %p41
      %p44 = scmp.ne.s32.totalorder %s27, %s43
      %p45 = scmp.eq.s32.totalorder %s19, 0
      %p46 = por %p44, %p45
      %s48 = sadd.s32 %s47, 1
      %p51 = scmp.eq.s32.totalorder %s13, 3
      %p52 = scmp.ne.s32.totalorder %s47, %s49
      %p53 = scmp.eq.s32.totalorder %s13, 0
      %p54 = por %p52, %p53
      %p55 = scmp.ne.s32.totalorder %s47, %s49
      %p56 = scmp.eq.s32.totalorder %s18, 3
      %p57 = por %p55, %p56
      %p58 = scmp.ne.s32.totalorder %s49, %s50
      %p59 = scmp.eq.s32.totalorder %s18, 0
      %p60 = por %p58, %p59
      %p61 = scmp.ne.s32.totalorder %s49, %s50
      %p62 = scmp.eq.s32.totalorder %s19, 3
      %p63 = por %p61, %p62
      %p65 = scmp.ne.s32.totalorder %s50, %s64
      %p66 = scmp.eq.s32.totalorder %s19, 0
      %p67 = por %p65, %p66
      %s69 = sadd.s32 %s68, 1
      %p72 = scmp.eq.s32.totalorder %s13, 3
      %p73 = scmp.ne.s32.totalorder %s68, %s70
      %p74 = scmp.eq.s32.totalorder %s13, 0
      %p75 = por %p73, %p74
      %p76 = scmp.ne.s32.totalorder %s68, %s70
      %p77 = scmp.eq.s32.totalorder %s18, 3
      %p78 = por %p76, %p77
      %p79 = scmp.ne.s32.totalorder %s70, %s71
      %p80 = scmp.eq.s32.totalorder %s18, 0
      %p81 = por %p79, %p80
      %p82 = scmp.ne.s32.totalorder %s70, %s71
      %p83 = scmp.eq.s32.totalorder %s19, 3
      %p84 = por %p82, %p83
      %p86 = scmp.ne.s32.totalorder %s71, %s85
      %p87 = scmp.eq.s32.totalorder %s19, 0
      %p88 = por %p86, %p87
      %s90 = sadd.s32 %s89, 1
      %p93 = scmp.eq.s32.totalorder %s13, 3
      %p94 = scmp.ne.s32.totalorder %s89, %s91
      %p95 = scmp.eq.s32.totalorder %s13, 0
      %p96 = por %p94, %p95
      %p97 = scmp.ne.s32.totalorder %s89, %s91
      %p98 = scmp.eq.s32.totalorder %s18, 3
      %p99 = por %p97, %p98
      %p100 = scmp.ne.s32.totalorder %s91, %s92
      %p101 = scmp.eq.s32.totalorder %s18, 0
      %p102 = por %p100, %p101
      %p103 = scmp.ne.s32.totalorder %s91, %s92
      %p104 = scmp.eq.s32.totalorder %s19, 3
      %p105 = por %p103, %p104
      %p107 = scmp.ne.s32.totalorder %s92, %s106
      %p108 = scmp.eq.s32.totalorder %s19, 0
      %p109 = por %p107, %p108
      %s110 = ssub.s32 %s13, %s20
      %p111 = scmp.eq.s32.totalorder %s110, 0
      %s113 = sadd.s32 %s112, 1
      %s114 = scalar_select %p111, %s112, %s113
      %p117 = pneg %p111
      %p118 = scmp.eq.s32.totalorder %s13, 3
      %p119 = por %p117, %p118
      %p120 = scmp.ne.s32.totalorder %s112, %s115
      %p121 = scmp.eq.s32.totalorder %s13, 0
      %p122 = por %p120, %p121
      %p123 = scmp.ne.s32.totalorder %s112, %s115
      %p124 = scmp.eq.s32.totalorder %s18, 3
      %p125 = por %p123, %p124
      %p126 = scmp.ne.s32.totalorder %s115, %s116
      %p127 = scmp.eq.s32.totalorder %s18, 0
      %p128 = por %p126, %p127
      %p129 = scmp.ne.s32.totalorder %s115, %s116
      %p130 = scmp.eq.s32.totalorder %s19, 3
      %p131 = por %p129, %p130
      %p133 = scmp.ne.s32.totalorder %s116, %s132
      %p134 = scmp.eq.s32.totalorder %s19, 0
      %p135 = por %p133, %p134
      %p136 = scmp.le.s32.totalorder 1, %s13
      %p137 = scmp.lt.s32.totalorder %s13, 5
      %p138 = pnand %p136, %p137
      %p139 = pneg %p138
      // Predicated region
      $region9: #{_embedding_block_impl.3} parent=5 // pred_check
        _
      $region10: #{_embedding_block_impl.3} parent=5 // pred_check_branch
        %141 = sbr.rel (%p138) target = $region12
      $region11: #{_embedding_block_impl.3} parent=5 // pred_region
        %s142 = ssub.s32 %s13, 1
        // Predicated region
        $region13: #{_embedding_block_impl.3} parent=11 // pred_check
          %p143 = pneg %p60
        $region14: #{_embedding_block_impl.3} parent=11 // pred_check_branch
          %145 = sbr.rel (%p143) target = $region16
        $region15: #{_embedding_block_impl.3} parent=11 // pred_region
          _
        $region16: #{_embedding_block_impl.3} parent=11 // pred_fallthru
          _
        // Predicated region
        $region17: #{_embedding_block_impl.3} parent=11 // pred_check
          %p146 = pneg %p81
        $region18: #{_embedding_block_impl.3} parent=11 // pred_check_branch
          %148 = sbr.rel (%p146) target = $region20
        $region19: #{_embedding_block_impl.3} parent=11 // pred_region
          _
        $region20: #{_embedding_block_impl.3} parent=11 // pred_fallthru
          _
        // Predicated region
        $region21: #{_embedding_block_impl.3} parent=11 // pred_check
          %p149 = pneg %p102
        $region22: #{_embedding_block_impl.3} parent=11 // pred_check_branch
          %151 = sbr.rel (%p149) target = $region24
        $region23: #{_embedding_block_impl.3} parent=11 // pred_region
          _
        $region24: #{_embedding_block_impl.3} parent=11 // pred_fallthru
          _
      $region12: #{_embedding_block_impl.3} parent=5 // pred_fallthru
        _
      %p152 = scmp.lt.s32.totalorder %s13, 4
      // Predicated region
      $region25: #{_embedding_block_impl.3} parent=5 // pred_check
        %p153 = pneg %p152
      $region26: #{_embedding_block_impl.3} parent=5 // pred_check_branch
        %155 = sbr.rel (%p153) target = $region28
      $region27: #{_embedding_block_impl.3} parent=5 // pred_region
        // Predicated region
        $region29: #{_embedding_block_impl.3} parent=27 // pred_check
          %p156 = pneg %p33
        $region30: #{_embedding_block_impl.3} parent=27 // pred_check_branch
          %158 = sbr.rel (%p156) target = $region32
        $region31: #{_embedding_block_impl.3} parent=27 // pred_region
          %s159 = smul.u32 2, %s13
          %p160 = scmp.lt.s32.totalorder %s159, 7
          %s161 = scalar_select %p160, %s159, 7
          %s162 = smul.addr %s161, 8
          %s163 = scalar_lea.vmem %s0, %s162
          %s164 = smul.u32 2, %s13
        $region32: #{_embedding_block_impl.3} parent=27 // pred_fallthru
          _
      $region28: #{_embedding_block_impl.3} parent=5 // pred_fallthru
        _
      %p165 = scmp.le.s32.totalorder 1, %s13
      %p166 = scmp.lt.s32.totalorder %s13, 5
      %p167 = pnand %p165, %p166
      %p168 = pneg %p167
      // Predicated region
      $region33: #{_embedding_block_impl.3} parent=5 // pred_check
        _
      $region34: #{_embedding_block_impl.3} parent=5 // pred_check_branch
        %170 = sbr.rel (%p167) target = $region36
      $region35: #{_embedding_block_impl.3} parent=5 // pred_region
        %s171 = ssub.s32 %s13, 1
        %s172 = smul.u32 2, %s18
        %p173 = scmp.lt.s32.totalorder %s172, 7
        %s174 = scalar_select %p173, %s172, 7
        %s175 = smul.addr %s174, 8
        %s176 = scalar_lea.vmem %s0, %s175
        %p177 = pneg %p39
        %p178 = pneg %p36
        %p179 = pneg %p60
        %p180 = pneg %p57
        %p181 = pneg %p81
        %p182 = pneg %p78
        %p183 = pneg %p102
        %p184 = pneg %p99
        %p185 = pneg %p128
        %p186 = pneg %p125
        %s187 = sand.u32 %s115, 1
        %s188 = scalar_lea.sflag [#allocation3], %s187
        %s189 = sand.u32 %s115, 1
        %s190 = smul.addr %s189, 16
        %s191 = scalar_lea.vmem [#allocation2], %s190
        %s192 = smul.u32 2, %s18
        %p193 = scmp.lt.s32.totalorder %s192, 7
        %s194 = scalar_select %p193, %s192, 7
        %s195 = smul.addr %s194, 8
        %s196 = scalar_lea.vmem %s0, %s195
        %s197 = smul.u32 2, %s18
        %s198 = smul.u32 2, %s18
        %v199 = vld [vmem:[%s196] sm:$0xff]
        %v200 = vld [vmem:[%s196 + $0x8] sm:$0xff]
        %v201 = vld [vmem:[%s1] sm:$0xff]
        %v202 = vld [vmem:[%s1 + $0x8] sm:$0xff]
        %v203 = vld [vmem:[%s1 + $0x10] sm:$0xff]
        %v204 = vld [vmem:[%s1 + $0x18] sm:$0xff]
        %vm205 = vcmask 261120
        %v207 = vsel %vm205, %v199, 0
        %v210 = vsel %vm205, %v200, 0
        %212 = vmatprep.subr.mxu0 0.0
        %213 = vmatpush1.msra.mxu0 %v201
        %214 = vmatprep.subr.mxu0 0.0
        %215 = vmatpush1.msra.mxu0 %v202
        %216 = vmatprep.subr.mxu0 0.0
        %217 = vmatpush1.msra.mxu0 %v203
        %218 = vmatprep.subr.mxu0 0.0
        %219 = vmatpush1.msra.mxu0 %v204
        %220 = vmatprep.subr.mxu0 0.0
        %221 = vmatpush1.msra.mxu0 0.0
        %222 = vmatprep.subr.mxu0 0.0
        %223 = vmatpush1.msra.mxu0 0.0
        %224 = vmatprep.subr.mxu0 0.0
        %225 = vmatpush1.msra.mxu0 0.0
        %226 = vmatprep.subr.mxu0 0.0
        %227 = vmatpush1.msra.mxu0 0.0
        %228 = vmatprep.subr.mxu0 0.0
        %229 = vmatpush1.msra.mxu0 0.0
        %230 = vmatprep.subr.mxu0 0.0
        %231 = vmatpush1.msra.mxu0 0.0
        %232 = vmatprep.subr.mxu0 0.0
        %233 = vmatpush1.msra.mxu0 0.0
        %234 = vmatprep.subr.mxu0 0.0
        %235 = vmatpush1.msra.mxu0 0.0
        %236 = vmatprep.subr.mxu0 0.0
        %237 = vmatpush1.msra.mxu0 0.0
        %238 = vmatprep.subr.mxu0 0.0
        %239 = vmatpush1.msra.mxu0 0.0
        %240 = vmatprep.subr.mxu0 0.0
        %241 = vmatpush1.msra.mxu0 0.0
        %242 = vmatprep.subr.mxu0 0.0
        %243 = vmatpush1.msra.mxu0 0.0
        %244 = vmatprep.subr.mxu0 0.0
        %245 = vmatpush1.msra.mxu0 0.0
        %246 = vmatprep.subr.mxu0 0.0
        %247 = vmatpush1.msra.mxu0 0.0
        %248 = vmatprep.subr.mxu0 0.0
        %249 = vmatpush1.msra.mxu0 0.0
        %250 = vmatprep.subr.mxu0 0.0
        %251 = vmatpush1.msra.mxu0 0.0
        %252 = vmatprep.subr.mxu0 0.0
        %253 = vmatpush1.msra.mxu0 0.0
        %254 = vmatprep.subr.mxu0 0.0
        %255 = vmatpush1.msra.mxu0 0.0
        %256 = vmatprep.subr.mxu0 0.0
        %257 = vmatpush1.msra.mxu0 0.0
        %258 = vmatprep.subr.mxu0 0.0
        %259 = vmatpush1.msra.mxu0 0.0
        %260 = vmatprep.subr.mxu0 0.0
        %261 = vmatpush1.msra.mxu0 0.0
        %262 = vmatprep.subr.mxu0 0.0
        %263 = vmatpush1.msra.mxu0 0.0
        %264 = vmatprep.subr.mxu0 0.0
        %265 = vmatpush1.msra.mxu0 0.0
        %266 = vmatprep.subr.mxu0 0.0
        %267 = vmatpush1.msra.mxu0 0.0
        %268 = vmatprep.subr.mxu0 0.0
        %269 = vmatpush1.msra.mxu0 0.0
        %270 = vmatprep.subr.mxu0 0.0
        %271 = vmatpush1.msra.mxu0 0.0
        %272 = vmatprep.subr.mxu0 0.0
        %273 = vmatpush1.msra.mxu0 0.0
        %274 = vmatprep.subr.mxu0 0.0
        %275 = vmatpush1.msra.mxu0 0.0
        %276 = vmatprep.mubr.f32.mxu0 0.0
        %277 = vmatmul.mubr.f32.gmra.mrb[0].mxu0 %v207
        %v278 = vpop.f32.mrb[0].mxu0
        %v279 = vadd.f32 0.0, %v278
        %v280 = vpop.f32.mrb[0].mxu0
        %281 = vmatprep.mubr.f32.mxu0 0.0
        %282 = vmatmul.mubr.f32.gmra.mrb[0].mxu0 %v210
        %v283 = vpop.f32.mrb[0].mxu0
        %v284 = vadd.f32 0.0, %v283
        %v285 = vpop.f32.mrb[0].mxu0
        %286 = vdwg.mxu0
        %v287 = vld [vmem:[%s2] sm:$0x1]
        %v289 = vlaneseq
        %v290 = vshrl.u32 %v289, 7
        %v291 = vsub.s32 0, %v290
        %v292 = vrot.slane %v287, %v291
        %v294 = vmul.f32 %v279, %v292
        %v295 = vmul.f32 %v284, %v292
        %v296 = vld [vmem:[%s3] sm:$0x1]
        %v298 = vlaneseq
        %v299 = vshrl.u32 %v298, 7
        %v300 = vsub.s32 0, %v299
        %v301 = vrot.slane %v296, %v300
        %v303 = vadd.f32 %v294, %v301
        %v304 = vadd.f32 %v295, %v301
        %305 = vst [vmem:[%s191] sm:$0xff] %v303
        %306 = vst [vmem:[%s191 + $0x8] sm:$0xff] %v304
        %s307 = sand.u32 %s115, 1
        %s308 = scalar_lea.sflag [#allocation3], %s307
        %s309 = sand.u32 %s115, 1
        %s310 = smul.addr %s309, 16
        %s311 = scalar_lea.vmem [#allocation2], %s310
        // Predicated region
        $region37: #{_embedding_block_impl.3} parent=35 // pred_check
          %p312 = pneg %p125
        $region38: #{_embedding_block_impl.3} parent=35 // pred_check_branch
          %314 = sbr.rel (%p312) target = $region40
        $region39: #{_embedding_block_impl.3} parent=35 // pred_region
          %s315 = smul.u32 2, %s18
          %s317 = ssub.s32 256, 256
          %318 = vsyncadd %s308, %s317
          %s319 = smul.addr %s315, 128
          %s320 = scalar_lea.hbm %s4, %s319
          %s321 = sshll.u32 %s311, 4
          %s322 = int_to_ptr.vmem [resolvable:$true] %s321
          %327 = dma.vmem_to_hbm [thread:$0]  %s322, 256, %s320, %s308, 128, 128, 8
        $region40: #{_embedding_block_impl.3} parent=35 // pred_fallthru
          _
      $region36: #{_embedding_block_impl.3} parent=5 // pred_fallthru
        _
      %p328 = scmp.le.s32.totalorder 2, %s13
      // Predicated region
      $region41: #{_embedding_block_impl.3} parent=5 // pred_check
        %p329 = pneg %p328
      $region42: #{_embedding_block_impl.3} parent=5 // pred_check_branch
        %331 = sbr.rel (%p329) target = $region44
      $region43: #{_embedding_block_impl.3} parent=5 // pred_region
        %s332 = ssub.s32 %s13, 2
        // Predicated region
        $region45: #{_embedding_block_impl.3} parent=43 // pred_check
          %p333 = pneg %p131
        $region46: #{_embedding_block_impl.3} parent=43 // pred_check_branch
          %335 = sbr.rel (%p333) target = $region48
        $region47: #{_embedding_block_impl.3} parent=43 // pred_region
          %s336 = sand.u32 %s116, 1
          %s337 = scalar_lea.sflag [#allocation3], %s336
          %s338 = sand.u32 %s116, 1
          %s339 = smul.addr %s338, 16
          %s340 = scalar_lea.vmem [#allocation2], %s339
          %341 = dma.done %s337, 256
        $region48: #{_embedding_block_impl.3} parent=43 // pred_fallthru
          _
      $region44: #{_embedding_block_impl.3} parent=5 // pred_fallthru
        _
    $region6: #{_embedding_block_impl.3} parent=1 // loop_footer
      %s17 = sadd.s32 1, %s13
    $region7: #{_embedding_block_impl.3} parent=1 // loop_footer_branch
      %12 = sbr.rel target = $region3
    $region8: #{_embedding_block_impl.3} parent=1 // loop_exit
      _
    %342 = vsyncpa [#allocation3], 1
    %s343 = scalar_lea.sflag [#allocation3], 1
    %344 = vsyncpa %s343, 1

</llo_original>
